<compile_context>
chip_gen: v7x
topology: tpu7x:2x2x1
jax: 0.10.0
libtpu: 0.0.40
codegen_flags: <defaults>
</compile_context>

<pallas_src>
import functools

import jax
import jax.numpy as jnp
from jax.experimental import pallas as pl
from jax.experimental.pallas import tpu as pltpu


def _round_up(n, m):
    return ((n + m - 1) // m) * m


def _vmem_capacity_bytes():
    """Per-TensorCore VMEM capacity (64 MiB on v7x, 128 MiB on v5e/v6e)."""
    try:
        return int(pltpu.get_tpu_info().vmem_capacity_bytes)
    except Exception:
        return 128 << 20


def _spec(block_shape, index_map, buffers=None):
    """BlockSpec with an optional explicit buffer count.

    buffers=1 -> grid-invariant (resident) operands are not double-buffered.
    buffers=3 -> deeper pipelining for HBM-bound streamed operands.
    Falls back to the default (double-buffered) spec if pipeline_mode is not
    supported by the installed jax.
    """
    if buffers is None:
        return pl.BlockSpec(block_shape, index_map)
    try:
        return pl.BlockSpec(block_shape, index_map,
                            pipeline_mode=pl.Buffered(buffers))
    except TypeError:
        return pl.BlockSpec(block_shape, index_map)


# --------------------------------------------------------------------------- #
# Fused kernel: all three layers on one (row_tile, features) block.           #
# --------------------------------------------------------------------------- #
def mlp_kernel(x_ref, w1_ref, b1_ref, w2_ref, b2_ref, w3_ref, b3_ref, o_ref):
    """MXU matmuls in the weights' dtype (bf16), f32 accumulation + elementwise."""
    mm_dtype = w1_ref.dtype
    x = x_ref[...].astype(mm_dtype)

    # Linear 1 + SiLU
    h = jnp.dot(x, w1_ref[...], preferred_element_type=jnp.float32) + b1_ref[...]
    h = h * jax.nn.sigmoid(h)

    # Linear 2 + ReLU
    h = jnp.dot(h.astype(mm_dtype), w2_ref[...],
                preferred_element_type=jnp.float32) + b2_ref[...]
    h = jnp.maximum(h, 0.0)

    # Linear 3
    y = jnp.dot(h.astype(mm_dtype), w3_ref[...],
                preferred_element_type=jnp.float32) + b3_ref[...]
    o_ref[...] = y.astype(o_ref.dtype)


# --------------------------------------------------------------------------- #
# Fallback kernel: one tiled Linear (+ optional activation), (M, N, K) grid.   #
# Used when the fused kernel's resident weights exceed the per-TC VMEM budget. #
# --------------------------------------------------------------------------- #
def _linear_kernel(x_ref, w_ref, b_ref, o_ref, acc_ref, *, activation):
    @pl.when(pl.program_id(2) == 0)
    def _():
        acc_ref[...] = jnp.zeros_like(acc_ref)

    acc_ref[...] += jnp.dot(x_ref[...].astype(w_ref.dtype), w_ref[...],
                            preferred_element_type=jnp.float32)

    @pl.when(pl.program_id(2) == pl.num_programs(2) - 1)
    def _():
        y = acc_ref[...] + b_ref[...]
        if activation == "silu":
            y = y * jax.nn.sigmoid(y)
        elif activation == "relu":
            y = jnp.maximum(y, 0.0)
        o_ref[...] = y.astype(o_ref.dtype)


def _tiled_linear(x2d, w, b, activation, *, matmul_dtype, tm, vmem_limit, out_dtype):
    rows, K = x2d.shape
    N = w.shape[1]
    tk = min(512, _round_up(K, 128))
    tn = min(512, _round_up(N, 128))
    k_p = _round_up(K, tk)
    n_p = _round_up(N, tn)

    xp = jnp.pad(x2d, ((0, 0), (0, k_p - K))) if k_p != K else x2d
    wp = jnp.pad(w, ((0, k_p - K), (0, n_p - N))).astype(matmul_dtype)
    bp = jnp.pad(b, ((0, 0), (0, n_p - N))).astype(jnp.float32)

    grid = (pl.cdiv(rows, tm), n_p // tn, k_p // tk)
    kernel = functools.partial(_linear_kernel, activation=activation)
    out = pl.pallas_call(
        kernel,
        out_shape=jax.ShapeDtypeStruct((rows, n_p), out_dtype),
        grid_spec=pltpu.PrefetchScalarGridSpec(
            num_scalar_prefetch=0,
            grid=grid,
            in_specs=[
                pl.BlockSpec((tm, tk), lambda i, j, k: (i, k)),
                pl.BlockSpec((tk, tn), lambda i, j, k: (k, j)),
                pl.BlockSpec((1, tn), lambda i, j, k: (0, j)),
            ],
            out_specs=pl.BlockSpec((tm, tn), lambda i, j, k: (i, j)),
            scratch_shapes=[pltpu.VMEM((tm, tn), jnp.float32)],
        ),
        compiler_params=pltpu.CompilerParams(
            dimension_semantics=("parallel", "parallel", "arbitrary"),
            vmem_limit_bytes=int(vmem_limit)),
    )(xp, wp, bp)
    return out[:, :N] if n_p != N else out


# --------------------------------------------------------------------------- #
# Wrapper                                                                      #
# --------------------------------------------------------------------------- #
def mlp_forward(x, params, *, row_tile=None, matmul_dtype=jnp.bfloat16):
    """x: (..., input_size). Mirrors MLP.forward (flatten leading dims, MLP, restore)."""
    w1, b1, w2, b2, w3, b3 = params          # (in,H) (1,H) (H,H) (1,H) (H,out) (1,out)
    orig_shape = x.shape
    in_size = orig_shape[-1]
    hid = w1.shape[1]
    out_size = w3.shape[1]

    x2d = x.reshape(-1, in_size)
    rows = x2d.shape[0]

    x_isz = jnp.dtype(x.dtype).itemsize
    mm_isz = jnp.dtype(matmul_dtype).itemsize

    # ---- generation-aware per-TensorCore VMEM budget -------------------------
    vmem_cap = _vmem_capacity_bytes()                       # 64 MiB v7x / 128 MiB v5e,v6e
    vmem_budget = int(min(vmem_cap - (12 << 20), vmem_cap * 0.85))
    vmem_budget = max(vmem_budget, 16 << 20)

    # ---- row tiling -----------------------------------------------------------
    sub = 8 if x_isz >= 4 else (16 if x_isz == 2 else 32)   # sublane tile for x dtype
    if row_tile is None:
        row_tile = 512 if vmem_cap >= (96 << 20) else 256   # big tiles on 128 MiB parts
    row_tile = max(sub, _round_up(row_tile, sub))           # (8,128) lowering constraint
    row_tile = min(row_tile, _round_up(rows, sub))
    # Ensure >= 2 parallel grid steps when possible (keeps both v7x TCs busy).
    if rows > sub and pl.cdiv(rows, row_tile) < 2:
        row_tile = max(sub, _round_up(pl.cdiv(rows, 2), sub))

    # Lane-dense (128-multiple) feature padding on the weight side only.
    in_p = _round_up(in_size, 128)
    hid_p = _round_up(hid, 128)
    out_p = _round_up(out_size, 128)

    # ---- does the fused (all-weights-resident, single-buffered) kernel fit? --
    weight_bytes = ((_round_up(in_size, 16) * hid_p + hid_p * hid_p + hid_p * out_p)
                    * mm_isz + (2 * hid_p + out_p) * 4)

    def fused_vmem(rt, stream_bufs):
        stream = stream_bufs * rt * (in_p + out_p) * x_isz          # x / out tiles
        interm = rt * (in_p * mm_isz + out_p * 4) + 4 * rt * hid_p * 4
        return weight_bytes + stream + interm + (2 << 20)           # + headroom

    stream_bufs = 3 if (hid_p <= 512
                        and fused_vmem(row_tile, 3) <= vmem_budget) else 2
    fused_row_tile = row_tile
    while fused_row_tile > sub and fused_vmem(fused_row_tile, stream_bufs) > vmem_budget:
        fused_row_tile = max(sub, _round_up(fused_row_tile // 2, sub))
    use_fused = fused_vmem(fused_row_tile, stream_bufs) <= vmem_budget

    if not use_fused:
        # Weights don't fit per-TC VMEM even single-buffered: layer-by-layer
        # tiled-matmul path (intermediates round-trip HBM, but it always compiles).
        # TODO(synk): a fancier fallback could keep W1/W3 resident and tile only W2.
        h = _tiled_linear(x2d, w1, b1, "silu", matmul_dtype=matmul_dtype,
                          tm=row_tile, vmem_limit=vmem_budget, out_dtype=jnp.float32)
        h = _tiled_linear(h, w2, b2, "relu", matmul_dtype=matmul_dtype,
                          tm=row_tile, vmem_limit=vmem_budget, out_dtype=jnp.float32)
        y = _tiled_linear(h, w3, b3, None, matmul_dtype=matmul_dtype,
                          tm=row_tile, vmem_limit=vmem_budget, out_dtype=x.dtype)
        return y.reshape(*orig_shape[:-1], out_size)

    # ---- fused path -----------------------------------------------------------
    row_tile = fused_row_tile
    w1p = jnp.pad(w1, ((0, 0), (0, hid_p - hid))).astype(matmul_dtype)
    w2p = jnp.pad(w2, ((0, hid_p - hid), (0, hid_p - hid))).astype(matmul_dtype)
    w3p = jnp.pad(w3, ((0, hid_p - hid), (0, out_p - out_size))).astype(matmul_dtype)
    b1p = jnp.pad(b1, ((0, 0), (0, hid_p - hid))).astype(jnp.float32)
    b2p = jnp.pad(b2, ((0, 0), (0, hid_p - hid))).astype(jnp.float32)
    b3p = jnp.pad(b3, ((0, 0), (0, out_p - out_size))).astype(jnp.float32)

    grid = (pl.cdiv(rows, row_tile),)   # remainder block masked by Pallas, no x pad
    flops = 2 * rows * (in_size * hid_p + hid_p * hid_p + hid_p * out_p)
    cost = pl.CostEstimate(
        flops=flops,
        transcendentals=rows * hid_p,                        # sigmoid inside SiLU
        bytes_accessed=(rows * in_size * x_isz + weight_bytes + rows * out_p * x_isz))

    def _call(use_pipeline_modes):
        wb = 1 if use_pipeline_modes else None               # resident weights: 1 buffer
        sb = stream_bufs if (use_pipeline_modes and stream_bufs != 2) else None
        return pl.pallas_call(
            mlp_kernel,
            out_shape=jax.ShapeDtypeStruct((rows, out_p), x.dtype),
            grid_spec=pltpu.PrefetchScalarGridSpec(
                num_scalar_prefetch=0,
                grid=grid,
                in_specs=[
                    _spec((row_tile, in_size), lambda i: (i, 0), sb),   # x (streamed)
                    _spec((in_size, hid_p), lambda i: (0, 0), wb),      # W1 (resident)
                    _spec((1, hid_p), lambda i: (0, 0), wb),            # b1
                    _spec((hid_p, hid_p), lambda i: (0, 0), wb),        # W2
                    _spec((1, hid_p), lambda i: (0, 0), wb),            # b2
                    _spec((hid_p, out_p), lambda i: (0, 0), wb),        # W3
                    _spec((1, out_p), lambda i: (0, 0), wb),            # b3
                ],
                out_specs=_spec((row_tile, out_p), lambda i: (i, 0), sb),
            ),
            compiler_params=pltpu.CompilerParams(
                dimension_semantics=("parallel",),
                vmem_limit_bytes=int(vmem_budget)),
            cost_estimate=cost,
        )(x2d, w1p, b1p, w2p, b2p, w3p, b3p)

    try:
        out = _call(True)
    except Exception:
        # Installed jax does not lower pipeline_mode=Buffered(...); fall back to
        # default double-buffering (correctness identical, slightly more VMEM).
        out = _call(False)

    if out_p != out_size:
        out = out[:, :out_size]      # narrow copy; in-kernel store stays lane-dense
    return out.reshape(*orig_shape[:-1], out_size)


# --------------------------------------------------------------------------- #
# Init + reference                                                             #
# --------------------------------------------------------------------------- #
def init_params(key, input_size, hidden_size, output_size, dtype=jnp.float32):
    """nn.Linear-style U(-1/sqrt(fan_in), 1/sqrt(fan_in)); weights stored (in, out)."""
    ks = jax.random.split(key, 6)

    def linear(kw, kb, fan_in, fan_out):
        bound = 1.0 / jnp.sqrt(fan_in)
        w = jax.random.uniform(kw, (fan_in, fan_out), dtype, -bound, bound)
        b = jax.random.uniform(kb, (1, fan_out), dtype, -bound, bound)
        return w, b

    w1, b1 = linear(ks[0], ks[1], input_size, hidden_size)
    w2, b2 = linear(ks[2], ks[3], hidden_size, hidden_size)
    w3, b3 = linear(ks[4], ks[5], hidden_size, output_size)
    return (w1, b1, w2, b2, w3, b3)


def mlp_reference(x, params, matmul_dtype=jnp.bfloat16):
    """Pure-JAX reference with the same bf16-matmul / f32-accumulate recipe."""
    w1, b1, w2, b2, w3, b3 = params
    x2d = x.reshape(-1, x.shape[-1])

    def mm(a, w):
        return jnp.dot(a.astype(matmul_dtype), w.astype(matmul_dtype),
                       preferred_element_type=jnp.float32)

    h = mm(x2d, w1) + b1
    h = h * jax.nn.sigmoid(h)
    h = jnp.maximum(mm(h, w2) + b2, 0.0)
    y = mm(h, w3) + b3
    return y.reshape(*x.shape[:-1], w3.shape[1]).astype(x.dtype)


if __name__ == "__main__":
    input_size, hidden_size, output_size = 32, 64, 16
    batch, seq = 2, 8

    key = jax.random.PRNGKey(0)
    k_x, k_p = jax.random.split(key)
    x = jax.random.normal(k_x, (batch, seq, input_size), jnp.float32)
    params = init_params(k_p, input_size, hidden_size, output_size)

    out = mlp_forward(x, params)
    jax.block_until_ready(out)

    ref = mlp_reference(x, params)
    assert out.shape == (batch, seq, output_size)
    assert jnp.allclose(out, ref, atol=1e-2, rtol=1e-2), \
        float(jnp.max(jnp.abs(out - ref)))

    print("KERNEL_OK")
</pallas_src>

<mosaic_0001>
module attributes {stable_mosaic.version = 11 : i64} {
  func.func @mlp_kernel(%arg0: i32, %arg1: memref<8x32xf32, #tpu.memory_space<vmem>>, %arg2: memref<32x128xbf16, #tpu.memory_space<vmem>>, %arg3: memref<1x128xf32, #tpu.memory_space<vmem>>, %arg4: memref<128x128xbf16, #tpu.memory_space<vmem>>, %arg5: memref<1x128xf32, #tpu.memory_space<vmem>>, %arg6: memref<128x128xbf16, #tpu.memory_space<vmem>>, %arg7: memref<1x128xf32, #tpu.memory_space<vmem>>, %arg8: memref<8x128xf32, #tpu.memory_space<vmem>>) attributes {dimension_semantics = [#tpu.dimension_semantics<parallel>], iteration_bounds = array<i64: 2>, scalar_prefetch = 0 : i64, scratch_operands = 0 : i64, tpu.core_type = #tpu.core_type<tc>, window_params = [{transform_indices = @transform_0, window_bounds = array<i64: 8, 32>}, {pipeline_mode = #tpu.pipeline_mode<synchronous>, transform_indices = @transform_1, window_bounds = array<i64: 32, 128>}, {pipeline_mode = #tpu.pipeline_mode<synchronous>, transform_indices = @transform_2, window_bounds = array<i64: 1, 128>}, {pipeline_mode = #tpu.pipeline_mode<synchronous>, transform_indices = @transform_3, window_bounds = array<i64: 128, 128>}, {pipeline_mode = #tpu.pipeline_mode<synchronous>, transform_indices = @transform_4, window_bounds = array<i64: 1, 128>}, {pipeline_mode = #tpu.pipeline_mode<synchronous>, transform_indices = @transform_5, window_bounds = array<i64: 128, 128>}, {pipeline_mode = #tpu.pipeline_mode<synchronous>, transform_indices = @transform_6, window_bounds = array<i64: 1, 128>}, {transform_indices = @transform_7, window_bounds = array<i64: 8, 128>}]} {
    %c0 = arith.constant 0 : index
    %c0_0 = arith.constant 0 : index
    %0 = vector.load %arg1[%c0, %c0_0] : memref<8x32xf32, #tpu.memory_space<vmem>>, vector<8x32xf32>
    %1 = arith.truncf %0 : vector<8x32xf32> to vector<8x32xbf16>
    %c0_1 = arith.constant 0 : index
    %c0_2 = arith.constant 0 : index
    %2 = vector.load %arg2[%c0_1, %c0_2] : memref<32x128xbf16, #tpu.memory_space<vmem>>, vector<32x128xbf16>
    %cst = arith.constant dense<0.000000e+00> : vector<8x128xf32>
    %3 = tpu.matmul %1, %2, %cst {dimension_numbers = #tpu.dot_dimension_numbers<[1], [0], [0], [1], [0, 0, 1, 1], [], []>} : vector<8x32xbf16>, vector<32x128xbf16>, vector<8x128xf32> -> vector<8x128xf32>
    %c0_3 = arith.constant 0 : index
    %c0_4 = arith.constant 0 : index
    %4 = vector.load %arg3[%c0_3, %c0_4] : memref<1x128xf32, #tpu.memory_space<vmem>>, vector<1x128xf32>
    %5 = vector.broadcast %4 : vector<1x128xf32> to vector<8x128xf32>
    %6 = arith.addf %3, %5 : vector<8x128xf32>
    %7 = arith.negf %6 : vector<8x128xf32>
    %8 = math.exp %7 : vector<8x128xf32>
    %cst_5 = arith.constant 1.000000e+00 : f32
    %9 = vector.broadcast %cst_5 : f32 to vector<8x128xf32>
    %10 = arith.addf %9, %8 : vector<8x128xf32>
    %11 = arith.divf %9, %10 : vector<8x128xf32>
    %12 = arith.mulf %6, %11 : vector<8x128xf32>
    %13 = arith.truncf %12 : vector<8x128xf32> to vector<8x128xbf16>
    %c0_6 = arith.constant 0 : index
    %c0_7 = arith.constant 0 : index
    %14 = vector.load %arg4[%c0_6, %c0_7] : memref<128x128xbf16, #tpu.memory_space<vmem>>, vector<128x128xbf16>
    %cst_8 = arith.constant dense<0.000000e+00> : vector<8x128xf32>
    %15 = tpu.matmul %13, %14, %cst_8 {dimension_numbers = #tpu.dot_dimension_numbers<[1], [0], [0], [1], [0, 0, 1, 1], [], []>} : vector<8x128xbf16>, vector<128x128xbf16>, vector<8x128xf32> -> vector<8x128xf32>
    %c0_9 = arith.constant 0 : index
    %c0_10 = arith.constant 0 : index
    %16 = vector.load %arg5[%c0_9, %c0_10] : memref<1x128xf32, #tpu.memory_space<vmem>>, vector<1x128xf32>
    %17 = vector.broadcast %16 : vector<1x128xf32> to vector<8x128xf32>
    %18 = arith.addf %15, %17 : vector<8x128xf32>
    %cst_11 = arith.constant 0.000000e+00 : f32
    %19 = vector.broadcast %cst_11 : f32 to vector<8x128xf32>
    %20 = arith.maximumf %18, %19 : vector<8x128xf32>
    %21 = arith.truncf %20 : vector<8x128xf32> to vector<8x128xbf16>
    %c0_12 = arith.constant 0 : index
    %c0_13 = arith.constant 0 : index
    %22 = vector.load %arg6[%c0_12, %c0_13] : memref<128x128xbf16, #tpu.memory_space<vmem>>, vector<128x128xbf16>
    %cst_14 = arith.constant dense<0.000000e+00> : vector<8x128xf32>
    %23 = tpu.matmul %21, %22, %cst_14 {dimension_numbers = #tpu.dot_dimension_numbers<[1], [0], [0], [1], [0, 0, 1, 1], [], []>} : vector<8x128xbf16>, vector<128x128xbf16>, vector<8x128xf32> -> vector<8x128xf32>
    %c0_15 = arith.constant 0 : index
    %c0_16 = arith.constant 0 : index
    %24 = vector.load %arg7[%c0_15, %c0_16] : memref<1x128xf32, #tpu.memory_space<vmem>>, vector<1x128xf32>
    %25 = vector.broadcast %24 : vector<1x128xf32> to vector<8x128xf32>
    %26 = arith.addf %23, %25 : vector<8x128xf32>
    %c0_17 = arith.constant 0 : index
    %c0_18 = arith.constant 0 : index
    %27 = vector.load %arg8[%c0_17, %c0_18] : memref<8x128xf32, #tpu.memory_space<vmem>>, vector<8x128xf32>
    tpu.vector_store %arg8[%c0_17, %c0_18], %26 {strides = array<i32>} : memref<8x128xf32, #tpu.memory_space<vmem>>, vector<8x128xf32>,
    return
  }
  func.func @transform_0(%arg0: i32) -> (i32, i32) {
    %c0_i32 = arith.constant 0 : i32
    %c0_i32_0 = arith.constant 0 : i32
    return %arg0, %c0_i32 : i32, i32
  }
  func.func @transform_1(%arg0: i32) -> (i32, i32) {
    %c0_i32 = arith.constant 0 : i32
    %c0_i32_0 = arith.constant 0 : i32
    %c0_i32_1 = arith.constant 0 : i32
    return %c0_i32, %c0_i32_0 : i32, i32
  }
  func.func @transform_2(%arg0: i32) -> (i32, i32) {
    %c0_i32 = arith.constant 0 : i32
    %c0_i32_0 = arith.constant 0 : i32
    %c0_i32_1 = arith.constant 0 : i32
    return %c0_i32, %c0_i32_0 : i32, i32
  }
  func.func @transform_3(%arg0: i32) -> (i32, i32) {
    %c0_i32 = arith.constant 0 : i32
    %c0_i32_0 = arith.constant 0 : i32
    %c0_i32_1 = arith.constant 0 : i32
    return %c0_i32, %c0_i32_0 : i32, i32
  }
  func.func @transform_4(%arg0: i32) -> (i32, i32) {
    %c0_i32 = arith.constant 0 : i32
    %c0_i32_0 = arith.constant 0 : i32
    %c0_i32_1 = arith.constant 0 : i32
    return %c0_i32, %c0_i32_0 : i32, i32
  }
  func.func @transform_5(%arg0: i32) -> (i32, i32) {
    %c0_i32 = arith.constant 0 : i32
    %c0_i32_0 = arith.constant 0 : i32
    %c0_i32_1 = arith.constant 0 : i32
    return %c0_i32, %c0_i32_0 : i32, i32
  }
  func.func @transform_6(%arg0: i32) -> (i32, i32) {
    %c0_i32 = arith.constant 0 : i32
    %c0_i32_0 = arith.constant 0 : i32
    %c0_i32_1 = arith.constant 0 : i32
    return %c0_i32, %c0_i32_0 : i32, i32
  }
  func.func @transform_7(%arg0: i32) -> (i32, i32) {
    %c0_i32 = arith.constant 0 : i32
    %c0_i32_0 = arith.constant 0 : i32
    return %arg0, %c0_i32 : i32, i32
  }
}

</mosaic_0001>

<llo_original>
// kernel: tpu_custom_call.1
$region0: #{tpu_custom_call.1}
  #allocation0 [shape = 'u32[]', space=smem, size = 0x4, offset = 0x4, fixed_abs, tag = 'smem constant byte address 0x4 - core index']
  #allocation1 [shape = 'u32[144,128]{1,0:T(1,128)}', space=vmem, size = 0x12000, scoped, tag = 'internal scratch']
  %s0 = inlined_call_operand.hbm [shape: f32[16,32], index: 0, kind: input, shape index: {}]
  %s1 = inlined_call_operand.hbm [shape: bf16[32,128], index: 1, kind: input, shape index: {}]
  %s2 = inlined_call_operand.hbm [shape: f32[1,128], index: 2, kind: input, shape index: {}]
  %s3 = inlined_call_operand.hbm [shape: bf16[128,128], index: 3, kind: input, shape index: {}]
  %s4 = inlined_call_operand.hbm [shape: f32[1,128], index: 4, kind: input, shape index: {}]
  %s5 = inlined_call_operand.hbm [shape: bf16[128,128], index: 5, kind: input, shape index: {}]
  %s6 = inlined_call_operand.hbm [shape: f32[1,128], index: 6, kind: input, shape index: {}]
  %s7 = inlined_call_operand.hbm [shape: f32[16,128], index: 7, kind: output, shape index: {}]
  %s8 = sld [smem:[#allocation0]]
  $region89: #{tpu_custom_call.1} parent=0
    _
  %s10 = ssub.s32 1, %s8
  %s11 = scalar_select 0, %s10, %s8
  $region1: #{tpu_custom_call.1} parent=0
    #allocation2 [shape = 'u8[8192]{0}', space=vmem, size = 0x2000, scoped, tag = 'input window, operand 0']
    #allocation3 [shape = 's32[2]{0}', space=sflag, size = 0x8, scoped, tag = 'scoped memory for tpu_custom_call.1']
    #allocation4 [shape = 's32[2]{0}', space=sflag, size = 0x8, scoped, tag = 'scoped memory for tpu_custom_call.1']
    #allocation5 [shape = 'u8[8192]{0}', space=vmem, size = 0x2000, scoped, tag = 'input window, operand 1, single buffered']
    #allocation6 [shape = 's32[1]{0}', space=sflag, size = 0x4, scoped, tag = 'scoped memory for tpu_custom_call.1']
    #allocation7 [shape = 'u8[512]{0}', space=vmem, size = 0x400, scoped, tag = 'input window, operand 2, single buffered']
    #allocation8 [shape = 'u8[32768]{0}', space=vmem, size = 0x8000, scoped, tag = 'input window, operand 3, single buffered']
    #allocation9 [shape = 's32[1]{0}', space=sflag, size = 0x4, scoped, tag = 'scoped memory for tpu_custom_call.1']
    #allocation10 [shape = 'u8[512]{0}', space=vmem, size = 0x400, scoped, tag = 'input window, operand 4, single buffered']
    #allocation11 [shape = 'u8[32768]{0}', space=vmem, size = 0x8000, scoped, tag = 'input window, operand 5, single buffered']
    #allocation12 [shape = 's32[1]{0}', space=sflag, size = 0x4, scoped, tag = 'scoped memory for tpu_custom_call.1']
    #allocation13 [shape = 'u8[512]{0}', space=vmem, size = 0x400, scoped, tag = 'input window, operand 6, single buffered']
    #allocation14 [shape = 'u8[8192]{0}', space=vmem, size = 0x2000, scoped, tag = 'output window, operand 0']
    %12 = vsyncpa [#allocation3], 0
    %s13 = scalar_lea.sflag [#allocation3], 1
    %14 = vsyncpa %s13, 0
    %15 = vsyncpa [#allocation6], 0
    %16 = vsyncpa [#allocation9], 0
    %17 = vsyncpa [#allocation12], 0
    %18 = vsyncpa [#allocation4], 0
    %s19 = scalar_lea.sflag [#allocation4], 1
    %20 = vsyncpa %s19, 0
    loop: start=0, step=1, limit=4
    $region2: #{tpu_custom_call.1} parent=1 // loop_pre_header
      _
    $region3: #{tpu_custom_call.1} parent=1 // loop_header
      %s22 = sphi 0, %s26
      %p23 = scmp.ge.s32.totalorder %s22, 4
      %s32 = sphi 0, %s34
      %s35 = sphi 0, %s32
      %s36 = sphi 0, %s35
      %s52 = sphi 0, %s36
      %s56 = sphi 0, %s56
      %s58 = sphi 0, %s56
      %s59 = sphi 0, %s58
      %s73 = sphi 0, %s59
      %s77 = sphi 0, %s77
      %s79 = sphi 0, %s77
      %s80 = sphi 0, %s79
      %s94 = sphi 0, %s80
      %s98 = sphi 0, %s98
      %s100 = sphi 0, %s98
      %s101 = sphi 0, %s100
      %s115 = sphi 0, %s101
      %s119 = sphi 0, %s119
      %s121 = sphi 0, %s119
      %s122 = sphi 0, %s121
      %s136 = sphi 0, %s122
      %s140 = sphi 0, %s140
      %s142 = sphi 0, %s140
      %s143 = sphi 0, %s142
      %s157 = sphi 0, %s143
      %s161 = sphi 0, %s161
      %s163 = sphi 0, %s161
      %s164 = sphi 0, %s163
      %s178 = sphi 0, %s164
      %s184 = sphi 0, %s186
      %s187 = sphi 0, %s184
      %s188 = sphi 0, %s187
      %s204 = sphi 0, %s188
    $region4: #{tpu_custom_call.1} parent=1 // loop_header_branch
      %25 = sbr.rel (%p23) target = $region8
    $region5: #{tpu_custom_call.1} parent=1 // loop_body
      %s27 = ssub.s32 %s22, 1
      %s28 = ssub.s32 %s22, 2
      %s29 = sadd.s32 %s22, 1
      %s30 = ssub.s32 %s22, %s29
      %p31 = scmp.eq.s32.totalorder %s30, 0
      %s33 = sadd.s32 %s32, 1
      %s34 = scalar_select %p31, %s32, %s33
      %p37 = pneg %p31
      %p38 = scmp.eq.s32.totalorder %s22, 1
      %p39 = por %p37, %p38
      %p40 = scmp.ne.s32.totalorder %s32, %s35
      %p41 = scmp.eq.s32.totalorder %s22, 0
      %p42 = por %p40, %p41
      %p43 = scmp.ne.s32.totalorder %s32, %s35
      %p44 = scmp.eq.s32.totalorder %s27, 1
      %p45 = por %p43, %p44
      %p46 = scmp.ne.s32.totalorder %s35, %s36
      %p47 = scmp.eq.s32.totalorder %s27, 0
      %p48 = por %p46, %p47
      %p49 = scmp.ne.s32.totalorder %s35, %s36
      %p50 = scmp.eq.s32.totalorder %s28, 1
      %p51 = por %p49, %p50
      %p53 = scmp.ne.s32.totalorder %s36, %s52
      %p54 = scmp.eq.s32.totalorder %s28, 0
      %p55 = por %p53, %p54
      %s57 = sadd.s32 %s56, 1
      %p60 = scmp.eq.s32.totalorder %s22, 1
      %p61 = scmp.ne.s32.totalorder %s56, %s58
      %p62 = scmp.eq.s32.totalorder %s22, 0
      %p63 = por %p61, %p62
      %p64 = scmp.ne.s32.totalorder %s56, %s58
      %p65 = scmp.eq.s32.totalorder %s27, 1
      %p66 = por %p64, %p65
      %p67 = scmp.ne.s32.totalorder %s58, %s59
      %p68 = scmp.eq.s32.totalorder %s27, 0
      %p69 = por %p67, %p68
      %p70 = scmp.ne.s32.totalorder %s58, %s59
      %p71 = scmp.eq.s32.totalorder %s28, 1
      %p72 = por %p70, %p71
      %p74 = scmp.ne.s32.totalorder %s59, %s73
      %p75 = scmp.eq.s32.totalorder %s28, 0
      %p76 = por %p74, %p75
      %s78 = sadd.s32 %s77, 1
      %p81 = scmp.eq.s32.totalorder %s22, 1
      %p82 = scmp.ne.s32.totalorder %s77, %s79
      %p83 = scmp.eq.s32.totalorder %s22, 0
      %p84 = por %p82, %p83
      %p85 = scmp.ne.s32.totalorder %s77, %s79
      %p86 = scmp.eq.s32.totalorder %s27, 1
      %p87 = por %p85, %p86
      %p88 = scmp.ne.s32.totalorder %s79, %s80
      %p89 = scmp.eq.s32.totalorder %s27, 0
      %p90 = por %p88, %p89
      %p91 = scmp.ne.s32.totalorder %s79, %s80
      %p92 = scmp.eq.s32.totalorder %s28, 1
      %p93 = por %p91, %p92
      %p95 = scmp.ne.s32.totalorder %s80, %s94
      %p96 = scmp.eq.s32.totalorder %s28, 0
      %p97 = por %p95, %p96
      %s99 = sadd.s32 %s98, 1
      %p102 = scmp.eq.s32.totalorder %s22, 1
      %p103 = scmp.ne.s32.totalorder %s98, %s100
      %p104 = scmp.eq.s32.totalorder %s22, 0
      %p105 = por %p103, %p104
      %p106 = scmp.ne.s32.totalorder %s98, %s100
      %p107 = scmp.eq.s32.totalorder %s27, 1
      %p108 = por %p106, %p107
      %p109 = scmp.ne.s32.totalorder %s100, %s101
      %p110 = scmp.eq.s32.totalorder %s27, 0
      %p111 = por %p109, %p110
      %p112 = scmp.ne.s32.totalorder %s100, %s101
      %p113 = scmp.eq.s32.totalorder %s28, 1
      %p114 = por %p112, %p113
      %p116 = scmp.ne.s32.totalorder %s101, %s115
      %p117 = scmp.eq.s32.totalorder %s28, 0
      %p118 = por %p116, %p117
      %s120 = sadd.s32 %s119, 1
      %p123 = scmp.eq.s32.totalorder %s22, 1
      %p124 = scmp.ne.s32.totalorder %s119, %s121
      %p125 = scmp.eq.s32.totalorder %s22, 0
      %p126 = por %p124, %p125
      %p127 = scmp.ne.s32.totalorder %s119, %s121
      %p128 = scmp.eq.s32.totalorder %s27, 1
      %p129 = por %p127, %p128
      %p130 = scmp.ne.s32.totalorder %s121, %s122
      %p131 = scmp.eq.s32.totalorder %s27, 0
      %p132 = por %p130, %p131
      %p133 = scmp.ne.s32.totalorder %s121, %s122
      %p134 = scmp.eq.s32.totalorder %s28, 1
      %p135 = por %p133, %p134
      %p137 = scmp.ne.s32.totalorder %s122, %s136
      %p138 = scmp.eq.s32.totalorder %s28, 0
      %p139 = por %p137, %p138
      %s141 = sadd.s32 %s140, 1
      %p144 = scmp.eq.s32.totalorder %s22, 1
      %p145 = scmp.ne.s32.totalorder %s140, %s142
      %p146 = scmp.eq.s32.totalorder %s22, 0
      %p147 = por %p145, %p146
      %p148 = scmp.ne.s32.totalorder %s140, %s142
      %p149 = scmp.eq.s32.totalorder %s27, 1
      %p150 = por %p148, %p149
      %p151 = scmp.ne.s32.totalorder %s142, %s143
      %p152 = scmp.eq.s32.totalorder %s27, 0
      %p153 = por %p151, %p152
      %p154 = scmp.ne.s32.totalorder %s142, %s143
      %p155 = scmp.eq.s32.totalorder %s28, 1
      %p156 = por %p154, %p155
      %p158 = scmp.ne.s32.totalorder %s143, %s157
      %p159 = scmp.eq.s32.totalorder %s28, 0
      %p160 = por %p158, %p159
      %s162 = sadd.s32 %s161, 1
      %p165 = scmp.eq.s32.totalorder %s22, 1
      %p166 = scmp.ne.s32.totalorder %s161, %s163
      %p167 = scmp.eq.s32.totalorder %s22, 0
      %p168 = por %p166, %p167
      %p169 = scmp.ne.s32.totalorder %s161, %s163
      %p170 = scmp.eq.s32.totalorder %s27, 1
      %p171 = por %p169, %p170
      %p172 = scmp.ne.s32.totalorder %s163, %s164
      %p173 = scmp.eq.s32.totalorder %s27, 0
      %p174 = por %p172, %p173
      %p175 = scmp.ne.s32.totalorder %s163, %s164
      %p176 = scmp.eq.s32.totalorder %s28, 1
      %p177 = por %p175, %p176
      %p179 = scmp.ne.s32.totalorder %s164, %s178
      %p180 = scmp.eq.s32.totalorder %s28, 0
      %p181 = por %p179, %p180
      %s182 = ssub.s32 %s22, %s29
      %p183 = scmp.eq.s32.totalorder %s182, 0
      %s185 = sadd.s32 %s184, 1
      %s186 = scalar_select %p183, %s184, %s185
      %p189 = pneg %p183
      %p190 = scmp.eq.s32.totalorder %s22, 1
      %p191 = por %p189, %p190
      %p192 = scmp.ne.s32.totalorder %s184, %s187
      %p193 = scmp.eq.s32.totalorder %s22, 0
      %p194 = por %p192, %p193
      %p195 = scmp.ne.s32.totalorder %s184, %s187
      %p196 = scmp.eq.s32.totalorder %s27, 1
      %p197 = por %p195, %p196
      %p198 = scmp.ne.s32.totalorder %s187, %s188
      %p199 = scmp.eq.s32.totalorder %s27, 0
      %p200 = por %p198, %p199
      %p201 = scmp.ne.s32.totalorder %s187, %s188
      %p202 = scmp.eq.s32.totalorder %s28, 1
      %p203 = por %p201, %p202
      %p205 = scmp.ne.s32.totalorder %s188, %s204
      %p206 = scmp.eq.s32.totalorder %s28, 0
      %p207 = por %p205, %p206
      %p208 = scmp.le.s32.totalorder 1, %s22
      %p209 = scmp.lt.s32.totalorder %s22, 3
      %p210 = pnand %p208, %p209
      %p211 = pneg %p210
      // Predicated region
      $region9: #{tpu_custom_call.1} parent=5 // pred_check
        _
      $region10: #{tpu_custom_call.1} parent=5 // pred_check_branch
        %213 = sbr.rel (%p210) target = $region12
      $region11: #{tpu_custom_call.1} parent=5 // pred_region
        %s214 = ssub.s32 %s22, 1
        // Predicated region
        $region13: #{tpu_custom_call.1} parent=11 // pred_check
          %p215 = pneg %p69
        $region14: #{tpu_custom_call.1} parent=11 // pred_check_branch
          %217 = sbr.rel (%p215) target = $region16
        $region15: #{tpu_custom_call.1} parent=11 // pred_region
          %s219 = ssub.s32 256, 256
          %220 = vsyncadd [#allocation6], %s219
          %s221 = sshll.u32 [#allocation5], 4
          %s222 = int_to_ptr.vmem [resolvable:$true] %s221
          %227 = dma.hbm_to_vmem [thread:$0]  %s1, 256, %s222, [#allocation6], 64, 64, 4
        $region16: #{tpu_custom_call.1} parent=11 // pred_fallthru
          _
        // Predicated region
        $region17: #{tpu_custom_call.1} parent=11 // pred_check
          %p228 = pneg %p90
        $region18: #{tpu_custom_call.1} parent=11 // pred_check_branch
          %230 = sbr.rel (%p228) target = $region20
        $region19: #{tpu_custom_call.1} parent=11 // pred_region
          %s232 = ssub.s32 16, 16
          %233 = vsyncadd [#allocation6], %s232
          %s235 = sshll.u32 [#allocation7], 4
          %s236 = int_to_ptr.vmem [resolvable:$true] %s235
          %238 = dma.hbm_to_vmem [thread:$0]  %s2, 16, %s236, [#allocation6]
        $region20: #{tpu_custom_call.1} parent=11 // pred_fallthru
          _
        // Predicated region
        $region21: #{tpu_custom_call.1} parent=11 // pred_check
          %p239 = pneg %p111
        $region22: #{tpu_custom_call.1} parent=11 // pred_check_branch
          %241 = sbr.rel (%p239) target = $region24
        $region23: #{tpu_custom_call.1} parent=11 // pred_region
          %s243 = ssub.s32 1024, 1024
          %244 = vsyncadd [#allocation9], %s243
          %s245 = sshll.u32 [#allocation8], 4
          %s246 = int_to_ptr.vmem [resolvable:$true] %s245
          %251 = dma.hbm_to_vmem [thread:$0]  %s3, 1024, %s246, [#allocation9], 64, 64, 4
        $region24: #{tpu_custom_call.1} parent=11 // pred_fallthru
          _
        // Predicated region
        $region25: #{tpu_custom_call.1} parent=11 // pred_check
          %p252 = pneg %p132
        $region26: #{tpu_custom_call.1} parent=11 // pred_check_branch
          %254 = sbr.rel (%p252) target = $region28
        $region27: #{tpu_custom_call.1} parent=11 // pred_region
          %s256 = ssub.s32 16, 16
          %257 = vsyncadd [#allocation9], %s256
          %s259 = sshll.u32 [#allocation10], 4
          %s260 = int_to_ptr.vmem [resolvable:$true] %s259
          %262 = dma.hbm_to_vmem [thread:$0]  %s4, 16, %s260, [#allocation9]
        $region28: #{tpu_custom_call.1} parent=11 // pred_fallthru
          _
        // Predicated region
        $region29: #{tpu_custom_call.1} parent=11 // pred_check
          %p263 = pneg %p153
        $region30: #{tpu_custom_call.1} parent=11 // pred_check_branch
          %265 = sbr.rel (%p263) target = $region32
        $region31: #{tpu_custom_call.1} parent=11 // pred_region
          %s267 = ssub.s32 1024, 1024
          %268 = vsyncadd [#allocation12], %s267
          %s269 = sshll.u32 [#allocation11], 4
          %s270 = int_to_ptr.vmem [resolvable:$true] %s269
          %275 = dma.hbm_to_vmem [thread:$0]  %s5, 1024, %s270, [#allocation12], 64, 64, 4
        $region32: #{tpu_custom_call.1} parent=11 // pred_fallthru
          _
        // Predicated region
        $region33: #{tpu_custom_call.1} parent=11 // pred_check
          %p276 = pneg %p174
        $region34: #{tpu_custom_call.1} parent=11 // pred_check_branch
          %278 = sbr.rel (%p276) target = $region36
        $region35: #{tpu_custom_call.1} parent=11 // pred_region
          %s280 = ssub.s32 16, 16
          %281 = vsyncadd [#allocation12], %s280
          %s283 = sshll.u32 [#allocation13], 4
          %s284 = int_to_ptr.vmem [resolvable:$true] %s283
          %286 = dma.hbm_to_vmem [thread:$0]  %s6, 16, %s284, [#allocation12]
        $region36: #{tpu_custom_call.1} parent=11 // pred_fallthru
          _
      $region12: #{tpu_custom_call.1} parent=5 // pred_fallthru
        _
      %p287 = scmp.lt.s32.totalorder %s22, 2
      // Predicated region
      $region37: #{tpu_custom_call.1} parent=5 // pred_check
        %p288 = pneg %p287
      $region38: #{tpu_custom_call.1} parent=5 // pred_check_branch
        %290 = sbr.rel (%p288) target = $region40
      $region39: #{tpu_custom_call.1} parent=5 // pred_region
        // Predicated region
        $region41: #{tpu_custom_call.1} parent=39 // pred_check
          %p291 = pneg %p42
        $region42: #{tpu_custom_call.1} parent=39 // pred_check_branch
          %293 = sbr.rel (%p291) target = $region44
        $region43: #{tpu_custom_call.1} parent=39 // pred_region
          %s294 = sand.u32 %s32, 1
          %s295 = scalar_lea.sflag [#allocation3], %s294
          %s296 = sand.u32 %s32, 1
          %s297 = smul.addr %s296, 8
          %s298 = scalar_lea.vmem [#allocation2], %s297
          %s300 = ssub.s32 128, 128
          %301 = vsyncadd %s295, %s300
          %s302 = smul.addr %s22, 128
          %s303 = scalar_lea.hbm %s0, %s302
          %s305 = sshll.u32 %s298, 4
          %s306 = int_to_ptr.vmem [resolvable:$true] %s305
          %308 = dma.hbm_to_vmem [thread:$0]  %s303, 128, %s306, %s295
        $region44: #{tpu_custom_call.1} parent=39 // pred_fallthru
          _
      $region40: #{tpu_custom_call.1} parent=5 // pred_fallthru
        _
      %p309 = scmp.le.s32.totalorder 1, %s22
      %p310 = scmp.lt.s32.totalorder %s22, 3
      %p311 = pnand %p309, %p310
      %p312 = pneg %p311
      // Predicated region
      $region45: #{tpu_custom_call.1} parent=5 // pred_check
        _
      $region46: #{tpu_custom_call.1} parent=5 // pred_check_branch
        %314 = sbr.rel (%p311) target = $region48
      $region47: #{tpu_custom_call.1} parent=5 // pred_region
        %s315 = ssub.s32 %s22, 1
        %s316 = sand.u32 %s35, 1
        %s317 = scalar_lea.sflag [#allocation3], %s316
        %s318 = sand.u32 %s35, 1
        %s319 = smul.addr %s318, 8
        %s320 = scalar_lea.vmem [#allocation2], %s319
        // Predicated region
        $region49: #{tpu_custom_call.1} parent=47 // pred_check
          %p321 = pneg %p48
        $region50: #{tpu_custom_call.1} parent=47 // pred_check_branch
          %323 = sbr.rel (%p321) target = $region52
        $region51: #{tpu_custom_call.1} parent=47 // pred_region
          %324 = dma.done %s317, 128
        $region52: #{tpu_custom_call.1} parent=47 // pred_fallthru
          _
        // Predicated region
        $region53: #{tpu_custom_call.1} parent=47 // pred_check
          %p325 = pneg %p69
        $region54: #{tpu_custom_call.1} parent=47 // pred_check_branch
          %327 = sbr.rel (%p325) target = $region56
        $region55: #{tpu_custom_call.1} parent=47 // pred_region
          %328 = dma.done [#allocation6], 256
        $region56: #{tpu_custom_call.1} parent=47 // pred_fallthru
          _
        // Predicated region
        $region57: #{tpu_custom_call.1} parent=47 // pred_check
          %p329 = pneg %p90
        $region58: #{tpu_custom_call.1} parent=47 // pred_check_branch
          %331 = sbr.rel (%p329) target = $region60
        $region59: #{tpu_custom_call.1} parent=47 // pred_region
          %332 = dma.done [#allocation6], 16
        $region60: #{tpu_custom_call.1} parent=47 // pred_fallthru
          _
        // Predicated region
        $region61: #{tpu_custom_call.1} parent=47 // pred_check
          %p333 = pneg %p111
        $region62: #{tpu_custom_call.1} parent=47 // pred_check_branch
          %335 = sbr.rel (%p333) target = $region64
        $region63: #{tpu_custom_call.1} parent=47 // pred_region
          %336 = dma.done [#allocation9], 1024
        $region64: #{tpu_custom_call.1} parent=47 // pred_fallthru
          _
        // Predicated region
        $region65: #{tpu_custom_call.1} parent=47 // pred_check
          %p337 = pneg %p132
        $region66: #{tpu_custom_call.1} parent=47 // pred_check_branch
          %339 = sbr.rel (%p337) target = $region68
        $region67: #{tpu_custom_call.1} parent=47 // pred_region
          %340 = dma.done [#allocation9], 16
        $region68: #{tpu_custom_call.1} parent=47 // pred_fallthru
          _
        // Predicated region
        $region69: #{tpu_custom_call.1} parent=47 // pred_check
          %p341 = pneg %p153
        $region70: #{tpu_custom_call.1} parent=47 // pred_check_branch
          %343 = sbr.rel (%p341) target = $region72
        $region71: #{tpu_custom_call.1} parent=47 // pred_region
          %344 = dma.done [#allocation12], 1024
        $region72: #{tpu_custom_call.1} parent=47 // pred_fallthru
          _
        // Predicated region
        $region73: #{tpu_custom_call.1} parent=47 // pred_check
          %p345 = pneg %p174
        $region74: #{tpu_custom_call.1} parent=47 // pred_check_branch
          %347 = sbr.rel (%p345) target = $region76
        $region75: #{tpu_custom_call.1} parent=47 // pred_region
          %348 = dma.done [#allocation12], 16
        $region76: #{tpu_custom_call.1} parent=47 // pred_fallthru
          _
        %s349 = sand.u32 %s35, 1
        %s350 = scalar_lea.sflag [#allocation3], %s349
        %s351 = sand.u32 %s35, 1
        %s352 = smul.addr %s351, 8
        %s353 = scalar_lea.vmem [#allocation2], %s352
        %p354 = pneg %p48
        %p355 = pneg %p45
        %p356 = pneg %p69
        %p357 = pneg %p66
        %p358 = pneg %p90
        %p359 = pneg %p87
        %p360 = pneg %p111
        %p361 = pneg %p108
        %p362 = pneg %p132
        %p363 = pneg %p129
        %p364 = pneg %p153
        %p365 = pneg %p150
        %p366 = pneg %p174
        %p367 = pneg %p171
        %p368 = pneg %p200
        %p369 = pneg %p197
        %s370 = sand.u32 %s187, 1
        %s371 = scalar_lea.sflag [#allocation4], %s370
        %s372 = sand.u32 %s187, 1
        %s373 = smul.addr %s372, 8
        %s374 = scalar_lea.vmem [#allocation14], %s373
        %v376 = vld [vmem:[%s320] sm:$0xff]
        %v377 = vpack.c.bf16 %v376, %v376
        %v378 = vld [vmem:[#allocation5] sm:$0xf]
        %v379 = vld [vmem:[#allocation5 + $0x4] sm:$0xf]
        %v380 = vld [vmem:[#allocation5 + $0x8] sm:$0xf]
        %v381 = vld [vmem:[#allocation5 + $0xc] sm:$0xf]
        %v382 = vld [vmem:[#allocation7] sm:$0x1]
        %v384 = vlaneseq
        %v385 = vshrl.u32 %v384, 7
        %v386 = vsub.s32 0, %v385
        %v387 = vrot.slane %v382, %v386
        %v393 = vunpack.c.l.b16 %v378
        %v394 = vunpack.c.l.b16 %v379
        %v395 = vunpack.c.l.b16 %v380
        %v396 = vunpack.c.l.b16 %v381
        %v397 = vpack.c.b16 %v394, %v393
        %v398 = vpack.c.b16 %v396, %v395
        %vm401 = vcmask 261120
        %v403 = vsel %vm401, %v377, 0
        %405 = vmatprep.subr.bf16.mxu0 0
        %406 = vmatpush1.bf16.msra.mxu0 %v397
        %407 = vmatprep.subr.bf16.mxu0 0
        %408 = vmatpush1.bf16.msra.mxu0 %v398
        %409 = vmatprep.subr.bf16.mxu0 0
        %410 = vmatpush1.bf16.msra.mxu0 0
        %411 = vmatprep.subr.bf16.mxu0 0
        %412 = vmatpush1.bf16.msra.mxu0 0
        %413 = vmatprep.subr.bf16.mxu0 0
        %414 = vmatpush1.bf16.msra.mxu0 0
        %415 = vmatprep.subr.bf16.mxu0 0
        %416 = vmatpush1.bf16.msra.mxu0 0
        %417 = vmatprep.subr.bf16.mxu0 0
        %418 = vmatpush1.bf16.msra.mxu0 0
        %419 = vmatprep.subr.bf16.mxu0 0
        %420 = vmatpush1.bf16.msra.mxu0 0
        %421 = vmatprep.subr.bf16.mxu0 0
        %422 = vmatpush1.bf16.msra.mxu0 0
        %423 = vmatprep.subr.bf16.mxu0 0
        %424 = vmatpush1.bf16.msra.mxu0 0
        %425 = vmatprep.subr.bf16.mxu0 0
        %426 = vmatpush1.bf16.msra.mxu0 0
        %427 = vmatprep.subr.bf16.mxu0 0
        %428 = vmatpush1.bf16.msra.mxu0 0
        %429 = vmatprep.subr.bf16.mxu0 0
        %430 = vmatpush1.bf16.msra.mxu0 0
        %431 = vmatprep.subr.bf16.mxu0 0
        %432 = vmatpush1.bf16.msra.mxu0 0
        %433 = vmatprep.subr.bf16.mxu0 0
        %434 = vmatpush1.bf16.msra.mxu0 0
        %435 = vmatprep.subr.bf16.mxu0 0
        %436 = vmatpush1.bf16.msra.mxu0 0
        %437 = vmatprep.mubr.bf16.mxu0 0
        %438 = vmatmul.mubr.bf16.gmra.mrb[0].mxu0 %v403
        %v439 = vpop.f32.mrb[0].mxu0
        %v440 = vadd.f32 %v387, %v439
        %v441 = vpop.f32.mrb[0].mxu0
        %v442 = vpop.f32.mrb[0].mxu0
        %v443 = vpop.f32.mrb[0].mxu0
        %444 = vdwg.mxu0
        %v445 = vxor.u32 %v440, 2147483648
        %v446 = vmul.f32 %v445, 1.442695
        %v447 = vpow.pop %v446
        %v448 = vadd.f32 %v447, 1.0
        %v449 = vrcp.pop %v448
        %v450 = vmul.f32 1.0, %v449
        %v451 = vmul.f32 %v440, %v450
        %v452 = vpack.c.bf16 %v451, %v451
        %v453 = vld [vmem:[#allocation8] sm:$0xf]
        %v454 = vld [vmem:[#allocation8 + $0x4] sm:$0xf]
        %v455 = vld [vmem:[#allocation8 + $0x8] sm:$0xf]
        %v456 = vld [vmem:[#allocation8 + $0xc] sm:$0xf]
        %v457 = vld [vmem:[#allocation8 + $0x10] sm:$0xf]
        %v458 = vld [vmem:[#allocation8 + $0x14] sm:$0xf]
        %v459 = vld [vmem:[#allocation8 + $0x18] sm:$0xf]
        %v460 = vld [vmem:[#allocation8 + $0x1c] sm:$0xf]
        %v461 = vld [vmem:[#allocation8 + $0x20] sm:$0xf]
        %v462 = vld [vmem:[#allocation8 + $0x24] sm:$0xf]
        %v463 = vld [vmem:[#allocation8 + $0x28] sm:$0xf]
        %v464 = vld [vmem:[#allocation8 + $0x2c] sm:$0xf]
        %v465 = vld [vmem:[#allocation8 + $0x30] sm:$0xf]
        %v466 = vld [vmem:[#allocation8 + $0x34] sm:$0xf]
        %v467 = vld [vmem:[#allocation8 + $0x38] sm:$0xf]
        %v468 = vld [vmem:[#allocation8 + $0x3c] sm:$0xf]
        %v469 = vld [vmem:[#allocation10] sm:$0x1]
        %v471 = vlaneseq
        %v472 = vshrl.u32 %v471, 7
        %v473 = vsub.s32 0, %v472
        %v474 = vrot.slane %v469, %v473
        %v492 = vunpack.c.l.b16 %v453
        %v493 = vunpack.c.l.b16 %v454
        %v494 = vunpack.c.l.b16 %v455
        %v495 = vunpack.c.l.b16 %v456
        %v496 = vunpack.c.l.b16 %v457
        %v497 = vunpack.c.l.b16 %v458
        %v498 = vunpack.c.l.b16 %v459
        %v499 = vunpack.c.l.b16 %v460
        %v500 = vunpack.c.l.b16 %v461
        %v501 = vunpack.c.l.b16 %v462
        %v502 = vunpack.c.l.b16 %v463
        %v503 = vunpack.c.l.b16 %v464
        %v504 = vunpack.c.l.b16 %v465
        %v505 = vunpack.c.l.b16 %v466
        %v506 = vunpack.c.l.b16 %v467
        %v507 = vunpack.c.l.b16 %v468
        %v508 = vpack.c.b16 %v493, %v492
        %v509 = vpack.c.b16 %v495, %v494
        %v510 = vpack.c.b16 %v497, %v496
        %v511 = vpack.c.b16 %v499, %v498
        %v512 = vpack.c.b16 %v501, %v500
        %v513 = vpack.c.b16 %v503, %v502
        %v514 = vpack.c.b16 %v505, %v504
        %v515 = vpack.c.b16 %v507, %v506
        %524 = vmatprep.subr.bf16.mxu0 0
        %525 = vmatpush1.bf16.msra.mxu0 %v508
        %526 = vmatprep.subr.bf16.mxu0 0
        %527 = vmatpush1.bf16.msra.mxu0 %v509
        %528 = vmatprep.subr.bf16.mxu0 0
        %529 = vmatpush1.bf16.msra.mxu0 %v510
        %530 = vmatprep.subr.bf16.mxu0 0
        %531 = vmatpush1.bf16.msra.mxu0 %v511
        %532 = vmatprep.subr.bf16.mxu0 0
        %533 = vmatpush1.bf16.msra.mxu0 %v512
        %534 = vmatprep.subr.bf16.mxu0 0
        %535 = vmatpush1.bf16.msra.mxu0 %v513
        %536 = vmatprep.subr.bf16.mxu0 0
        %537 = vmatpush1.bf16.msra.mxu0 %v514
        %538 = vmatprep.subr.bf16.mxu0 0
        %539 = vmatpush1.bf16.msra.mxu0 %v515
        %540 = vmatprep.subr.bf16.mxu0 0
        %541 = vmatpush1.bf16.msra.mxu0 0
        %542 = vmatprep.subr.bf16.mxu0 0
        %543 = vmatpush1.bf16.msra.mxu0 0
        %544 = vmatprep.subr.bf16.mxu0 0
        %545 = vmatpush1.bf16.msra.mxu0 0
        %546 = vmatprep.subr.bf16.mxu0 0
        %547 = vmatpush1.bf16.msra.mxu0 0
        %548 = vmatprep.subr.bf16.mxu0 0
        %549 = vmatpush1.bf16.msra.mxu0 0
        %550 = vmatprep.subr.bf16.mxu0 0
        %551 = vmatpush1.bf16.msra.mxu0 0
        %552 = vmatprep.subr.bf16.mxu0 0
        %553 = vmatpush1.bf16.msra.mxu0 0
        %554 = vmatprep.subr.bf16.mxu0 0
        %555 = vmatpush1.bf16.msra.mxu0 0
        %556 = vmatprep.mubr.bf16.mxu0 0
        %557 = vmatmul.mubr.bf16.gmra.mrb[0].mxu0 %v452
        %v558 = vpop.f32.mrb[0].mxu0
        %v559 = vadd.f32 %v474, %v558
        %v560 = vpop.f32.mrb[0].mxu0
        %v561 = vpop.f32.mrb[0].mxu0
        %v562 = vpop.f32.mrb[0].mxu0
        %563 = vdwg.mxu0
        %v564 = vmax.f32 %v559, 0.0
        %v565 = vpack.c.bf16 %v564, %v564
        %v566 = vld [vmem:[#allocation11] sm:$0xf]
        %v567 = vld [vmem:[#allocation11 + $0x4] sm:$0xf]
        %v568 = vld [vmem:[#allocation11 + $0x8] sm:$0xf]
        %v569 = vld [vmem:[#allocation11 + $0xc] sm:$0xf]
        %v570 = vld [vmem:[#allocation11 + $0x10] sm:$0xf]
        %v571 = vld [vmem:[#allocation11 + $0x14] sm:$0xf]
        %v572 = vld [vmem:[#allocation11 + $0x18] sm:$0xf]
        %v573 = vld [vmem:[#allocation11 + $0x1c] sm:$0xf]
        %v574 = vld [vmem:[#allocation11 + $0x20] sm:$0xf]
        %v575 = vld [vmem:[#allocation11 + $0x24] sm:$0xf]
        %v576 = vld [vmem:[#allocation11 + $0x28] sm:$0xf]
        %v577 = vld [vmem:[#allocation11 + $0x2c] sm:$0xf]
        %v578 = vld [vmem:[#allocation11 + $0x30] sm:$0xf]
        %v579 = vld [vmem:[#allocation11 + $0x34] sm:$0xf]
        %v580 = vld [vmem:[#allocation11 + $0x38] sm:$0xf]
        %v581 = vld [vmem:[#allocation11 + $0x3c] sm:$0xf]
        %v582 = vld [vmem:[#allocation13] sm:$0x1]
        %v584 = vlaneseq
        %v585 = vshrl.u32 %v584, 7
        %v586 = vsub.s32 0, %v585
        %v587 = vrot.slane %v582, %v586
        %v605 = vunpack.c.l.b16 %v566
        %v606 = vunpack.c.l.b16 %v567
        %v607 = vunpack.c.l.b16 %v568
        %v608 = vunpack.c.l.b16 %v569
        %v609 = vunpack.c.l.b16 %v570
        %v610 = vunpack.c.l.b16 %v571
        %v611 = vunpack.c.l.b16 %v572
        %v612 = vunpack.c.l.b16 %v573
        %v613 = vunpack.c.l.b16 %v574
        %v614 = vunpack.c.l.b16 %v575
        %v615 = vunpack.c.l.b16 %v576
        %v616 = vunpack.c.l.b16 %v577
        %v617 = vunpack.c.l.b16 %v578
        %v618 = vunpack.c.l.b16 %v579
        %v619 = vunpack.c.l.b16 %v580
        %v620 = vunpack.c.l.b16 %v581
        %v621 = vpack.c.b16 %v606, %v605
        %v622 = vpack.c.b16 %v608, %v607
        %v623 = vpack.c.b16 %v610, %v609
        %v624 = vpack.c.b16 %v612, %v611
        %v625 = vpack.c.b16 %v614, %v613
        %v626 = vpack.c.b16 %v616, %v615
        %v627 = vpack.c.b16 %v618, %v617
        %v628 = vpack.c.b16 %v620, %v619
        %637 = vmatprep.subr.bf16.mxu0 0
        %638 = vmatpush1.bf16.msra.mxu0 %v621
        %639 = vmatprep.subr.bf16.mxu0 0
        %640 = vmatpush1.bf16.msra.mxu0 %v622
        %641 = vmatprep.subr.bf16.mxu0 0
        %642 = vmatpush1.bf16.msra.mxu0 %v623
        %643 = vmatprep.subr.bf16.mxu0 0
        %644 = vmatpush1.bf16.msra.mxu0 %v624
        %645 = vmatprep.subr.bf16.mxu0 0
        %646 = vmatpush1.bf16.msra.mxu0 %v625
        %647 = vmatprep.subr.bf16.mxu0 0
        %648 = vmatpush1.bf16.msra.mxu0 %v626
        %649 = vmatprep.subr.bf16.mxu0 0
        %650 = vmatpush1.bf16.msra.mxu0 %v627
        %651 = vmatprep.subr.bf16.mxu0 0
        %652 = vmatpush1.bf16.msra.mxu0 %v628
        %653 = vmatprep.subr.bf16.mxu0 0
        %654 = vmatpush1.bf16.msra.mxu0 0
        %655 = vmatprep.subr.bf16.mxu0 0
        %656 = vmatpush1.bf16.msra.mxu0 0
        %657 = vmatprep.subr.bf16.mxu0 0
        %658 = vmatpush1.bf16.msra.mxu0 0
        %659 = vmatprep.subr.bf16.mxu0 0
        %660 = vmatpush1.bf16.msra.mxu0 0
        %661 = vmatprep.subr.bf16.mxu0 0
        %662 = vmatpush1.bf16.msra.mxu0 0
        %663 = vmatprep.subr.bf16.mxu0 0
        %664 = vmatpush1.bf16.msra.mxu0 0
        %665 = vmatprep.subr.bf16.mxu0 0
        %666 = vmatpush1.bf16.msra.mxu0 0
        %667 = vmatprep.subr.bf16.mxu0 0
        %668 = vmatpush1.bf16.msra.mxu0 0
        %669 = vmatprep.mubr.bf16.mxu0 0
        %670 = vmatmul.mubr.bf16.gmra.mrb[0].mxu0 %v565
        %v671 = vpop.f32.mrb[0].mxu0
        %v672 = vadd.f32 %v587, %v671
        %v673 = vpop.f32.mrb[0].mxu0
        %v674 = vpop.f32.mrb[0].mxu0
        %v675 = vpop.f32.mrb[0].mxu0
        %676 = vdwg.mxu0
        %677 = vst [vmem:[%s374] sm:$0xff] %v672
        %s678 = sand.u32 %s187, 1
        %s679 = scalar_lea.sflag [#allocation4], %s678
        %s680 = sand.u32 %s187, 1
        %s681 = smul.addr %s680, 8
        %s682 = scalar_lea.vmem [#allocation14], %s681
        // Predicated region
        $region77: #{tpu_custom_call.1} parent=47 // pred_check
          %p683 = pneg %p197
        $region78: #{tpu_custom_call.1} parent=47 // pred_check_branch
          %685 = sbr.rel (%p683) target = $region80
        $region79: #{tpu_custom_call.1} parent=47 // pred_region
          %s687 = ssub.s32 128, 128
          %688 = vsyncadd %s679, %s687
          %s689 = smul.addr %s27, 128
          %s690 = scalar_lea.hbm %s7, %s689
          %s692 = sshll.u32 %s682, 4
          %s693 = int_to_ptr.vmem [resolvable:$true] %s692
          %695 = dma.vmem_to_hbm [thread:$0]  %s693, 128, %s690, %s679
        $region80: #{tpu_custom_call.1} parent=47 // pred_fallthru
          _
      $region48: #{tpu_custom_call.1} parent=5 // pred_fallthru
        _
      %p696 = scmp.le.s32.totalorder 2, %s22
      // Predicated region
      $region81: #{tpu_custom_call.1} parent=5 // pred_check
        %p697 = pneg %p696
      $region82: #{tpu_custom_call.1} parent=5 // pred_check_branch
        %699 = sbr.rel (%p697) target = $region84
      $region83: #{tpu_custom_call.1} parent=5 // pred_region
        %s700 = ssub.s32 %s22, 2
        // Predicated region
        $region85: #{tpu_custom_call.1} parent=83 // pred_check
          %p701 = pneg %p203
        $region86: #{tpu_custom_call.1} parent=83 // pred_check_branch
          %703 = sbr.rel (%p701) target = $region88
        $region87: #{tpu_custom_call.1} parent=83 // pred_region
          %s704 = sand.u32 %s188, 1
          %s705 = scalar_lea.sflag [#allocation4], %s704
          %s706 = sand.u32 %s188, 1
          %s707 = smul.addr %s706, 8
          %s708 = scalar_lea.vmem [#allocation14], %s707
          %709 = dma.done %s705, 128
        $region88: #{tpu_custom_call.1} parent=83 // pred_fallthru
          _
      $region84: #{tpu_custom_call.1} parent=5 // pred_fallthru
        _
    $region6: #{tpu_custom_call.1} parent=1 // loop_footer
      %s26 = sadd.s32 1, %s22
    $region7: #{tpu_custom_call.1} parent=1 // loop_footer_branch
      %21 = sbr.rel target = $region3
    $region8: #{tpu_custom_call.1} parent=1 // loop_exit
      _
    %710 = vsyncpa [#allocation3], 1
    %s711 = scalar_lea.sflag [#allocation3], 1
    %712 = vsyncpa %s711, 1
    %713 = vsyncpa [#allocation6], 1
    %714 = vsyncpa [#allocation9], 1
    %715 = vsyncpa [#allocation12], 1
    %716 = vsyncpa [#allocation4], 1
    %s717 = scalar_lea.sflag [#allocation4], 1
    %718 = vsyncpa %s717, 1

</llo_original>
